<compile_context>
chip_gen: v5e
topology: v5e:2x2
jax: 0.10.0
libtpu: 0.0.40
codegen_flags: <defaults>
</compile_context>

<pallas_src>
import jax
import jax.numpy as jnp
from jax.experimental import pallas as pl
from jax.experimental.pallas import tpu as pltpu


def _fused_permute_linear_add_kernel(x_ref, w_ref, b_ref, o_ref):
    # x_ref: (D, bs) tile of x[b, :, s0:s0+bs] -- native feature-major layout.
    # w_ref: (D, D)  nn.Linear weight, native (out_features, in_features) layout.
    # b_ref: (1, D)  bias row.
    # o_ref: (bs, D) tile of the (B, S, D) output.
    xt = x_ref[...]                                                    # (D, bs)
    # v2^T = W @ x_tile : canonical A.B MXU matmul, f32 accumulation.
    v2_t = jnp.dot(w_ref[...], xt, preferred_element_type=jnp.float32)
    fused_t = xt.astype(jnp.float32) + v2_t                            # v1^T + v2^T
    # One XLU transpose per tile (its own VLIW slot, hidden under the DMAs),
    # then a lane-dense bias add and unmasked 128-lane stores.
    o_ref[...] = (jnp.transpose(fused_t) + b_ref[...]).astype(o_ref.dtype)


def _vmem_capacity_bytes():
    try:
        return int(pltpu.get_tpu_info().vmem_capacity_bytes)
    except Exception:
        return 64 * 1024 * 1024  # conservative default (v7x per-TC VMEM)


def _pick_block_s(S, D, B, vmem_bytes):
    """Sequence-block size (lane axis of the x tile / sublane axis of the out tile)."""
    # Per sequence column the pipeline holds the x tile + out tile, double
    # buffered: ~16*D bytes.  Keep that within ~1/4 of VMEM so the resident
    # weight and Mosaic scratch have headroom.
    budget = vmem_bytes // 4
    cap = (budget // (16 * D)) // 128 * 128
    cap = max(128, min(cap, 2048))
    if S <= cap and (S % 128 == 0 or S <= 1024):
        bs = S                                   # full extent: always layout-legal
    else:
        bs = min(cap, (S // 128) * 128)          # lane-dense blocks; padded tail via cdiv
    # v7x megacore: keep >1 grid step to shard when batch alone cannot provide it.
    if B == 1 and bs == S and S % 256 == 0:
        bs = S // 2
    return bs


def _vmem_limit_bytes(D, bs, vmem_bytes):
    need = (2 * D * D * 4            # resident (double-buffered) weight
            + 2 * 2 * D * bs * 4     # x-in + out tiles, double-buffered
            + 2 * D * 4              # bias
            + (4 << 20))             # Mosaic internal scratch / slack
    return int(min(max(need, 32 * 1024 * 1024), int(0.9 * vmem_bytes)))


def permute_linear_add(x, w, b):
    """x: (B, D, S), w: (D, D) [nn.Linear (out, in) layout], b: (D,)
       -> (B, S, D) = v1 + (v1 @ W.T + b),  v1 = x.permute(0, 2, 1)."""
    B, D, S = x.shape
    assert w.shape == (D, D), "residual add requires in_features == out_features"
    assert b.shape == (D,)

    vmem_bytes = _vmem_capacity_bytes()
    bs = _pick_block_s(S, D, B, vmem_bytes)
    grid = (B, pl.cdiv(S, bs))

    out = pl.pallas_call(
        _fused_permute_linear_add_kernel,
        out_shape=jax.ShapeDtypeStruct((B, S, D), x.dtype),
        grid=grid,
        in_specs=[
            # x read in native (B, D, S) layout: lane-dense along S, no wrapper copy.
            pl.BlockSpec((None, D, bs), lambda bi, si: (bi, 0, si)),
            # Weight resident in VMEM, native (out, in) layout (constant index map).
            pl.BlockSpec((D, D), lambda bi, si: (0, 0)),
            # Bias row, resident.
            pl.BlockSpec((1, D), lambda bi, si: (0, 0)),
        ],
        out_specs=pl.BlockSpec((None, bs, D), lambda bi, si: (bi, si, 0)),
        compiler_params=pltpu.CompilerParams(
            dimension_semantics=("parallel", "parallel"),
            vmem_limit_bytes=_vmem_limit_bytes(D, bs, vmem_bytes),
        ),
    )(x, w, b.reshape(1, D))
    return out


def _reference(x, w, b):
    v1 = jnp.transpose(x, (0, 2, 1))          # (B, S, D)
    v2 = v1 @ w.T + b                          # (B, S, D)
    return v1 + v2


if __name__ == "__main__":
    key = jax.random.PRNGKey(0)
    kx, kw, kb = jax.random.split(key, 3)

    # Small, self-consistent shapes: square Linear(D, D) so the residual add is
    # well defined; D is a multiple of 128 (lane-dense output), S a multiple of
    # 128 (lane-dense native-layout x reads), and the grid has B*nS >= 2 blocks.
    B, D, S = 2, 128, 128

    x = jax.random.normal(kx, (B, D, S), dtype=jnp.float32)

    # Deterministic nn.Linear-style init: U(-1/sqrt(D), 1/sqrt(D))
    bound = 1.0 / (D ** 0.5)
    w = jax.random.uniform(kw, (D, D), jnp.float32, -bound, bound)
    b = jax.random.uniform(kb, (D,), jnp.float32, -bound, bound)

    out = jax.block_until_ready(permute_linear_add(x, w, b))

    ref = _reference(x, w, b)
    assert out.shape == (B, S, D)
    assert jnp.allclose(out, ref, atol=1e-4, rtol=1e-4), \
        float(jnp.max(jnp.abs(out - ref)))

    print("KERNEL_OK")
</pallas_src>

<mosaic_0001>
module attributes {stable_mosaic.version = 11 : i64} {
  func.func @_fused_permute_linear_add_kernel(%arg0: i32, %arg1: i32, %arg2: memref<1x128x128xf32, #tpu.memory_space<vmem>>, %arg3: memref<128x128xf32, #tpu.memory_space<vmem>>, %arg4: memref<1x128xf32, #tpu.memory_space<vmem>>, %arg5: memref<1x128x128xf32, #tpu.memory_space<vmem>>) attributes {dimension_semantics = [#tpu.dimension_semantics<parallel>, #tpu.dimension_semantics<parallel>], iteration_bounds = array<i64: 2, 1>, scalar_prefetch = 0 : i64, scratch_operands = 0 : i64, tpu.core_type = #tpu.core_type<tc>, window_params = [{transform_indices = @transform_0, window_bounds = array<i64: 1, 128, 128>}, {pipeline_mode = #tpu.pipeline_mode<synchronous>, transform_indices = @transform_1, window_bounds = array<i64: 128, 128>}, {pipeline_mode = #tpu.pipeline_mode<synchronous>, transform_indices = @transform_2, window_bounds = array<i64: 1, 128>}, {transform_indices = @transform_3, window_bounds = array<i64: 1, 128, 128>}]} {
    %c0 = arith.constant 0 : index
    %c0_0 = arith.constant 0 : index
    %c0_1 = arith.constant 0 : index
    %0 = vector.load %arg2[%c0, %c0_0, %c0_1] : memref<1x128x128xf32, #tpu.memory_space<vmem>>, vector<1x128x128xf32>
    %1 = vector.shape_cast %0 : vector<1x128x128xf32> to vector<128x128xf32>
    %c0_2 = arith.constant 0 : index
    %c0_3 = arith.constant 0 : index
    %2 = vector.load %arg3[%c0_2, %c0_3] : memref<128x128xf32, #tpu.memory_space<vmem>>, vector<128x128xf32>
    %cst = arith.constant dense<0.000000e+00> : vector<128x128xf32>
    %3 = tpu.matmul %2, %1, %cst {dimension_numbers = #tpu.dot_dimension_numbers<[1], [0], [0], [1], [0, 0, 1, 1], [], []>} : vector<128x128xf32>, vector<128x128xf32>, vector<128x128xf32> -> vector<128x128xf32>
    %4 = arith.addf %1, %3 : vector<128x128xf32>
    %5 = tpu.transpose %4, [1, 0] : vector<128x128xf32> -> vector<128x128xf32>
    %c0_4 = arith.constant 0 : index
    %c0_5 = arith.constant 0 : index
    %6 = vector.load %arg4[%c0_4, %c0_5] : memref<1x128xf32, #tpu.memory_space<vmem>>, vector<1x128xf32>
    %7 = vector.broadcast %6 : vector<1x128xf32> to vector<128x128xf32>
    %8 = arith.addf %5, %7 : vector<128x128xf32>
    %c0_6 = arith.constant 0 : index
    %c0_7 = arith.constant 0 : index
    %c0_8 = arith.constant 0 : index
    %9 = vector.load %arg5[%c0_6, %c0_7, %c0_8] : memref<1x128x128xf32, #tpu.memory_space<vmem>>, vector<1x128x128xf32>
    %10 = vector.shape_cast %9 : vector<1x128x128xf32> to vector<128x128xf32>
    %11 = vector.shape_cast %8 : vector<128x128xf32> to vector<1x128x128xf32>
    tpu.vector_store %arg5[%c0_6, %c0_7, %c0_8], %11 {strides = array<i32>} : memref<1x128x128xf32, #tpu.memory_space<vmem>>, vector<1x128x128xf32>,
    return
  }
  func.func @transform_0(%arg0: i32, %arg1: i32) -> (i32, i32, i32) {
    %c0_i32 = arith.constant 0 : i32
    %c0_i32_0 = arith.constant 0 : i32
    return %arg0, %c0_i32, %arg1 : i32, i32, i32
  }
  func.func @transform_1(%arg0: i32, %arg1: i32) -> (i32, i32) {
    %c0_i32 = arith.constant 0 : i32
    %c0_i32_0 = arith.constant 0 : i32
    %c0_i32_1 = arith.constant 0 : i32
    return %c0_i32, %c0_i32_0 : i32, i32
  }
  func.func @transform_2(%arg0: i32, %arg1: i32) -> (i32, i32) {
    %c0_i32 = arith.constant 0 : i32
    %c0_i32_0 = arith.constant 0 : i32
    %c0_i32_1 = arith.constant 0 : i32
    return %c0_i32, %c0_i32_0 : i32, i32
  }
  func.func @transform_3(%arg0: i32, %arg1: i32) -> (i32, i32, i32) {
    %c0_i32 = arith.constant 0 : i32
    %c0_i32_0 = arith.constant 0 : i32
    return %arg0, %arg1, %c0_i32 : i32, i32, i32
  }
}

</mosaic_0001>

<llo_original>
// kernel: tpu_custom_call.1
$region0: #{tpu_custom_call.1}
  #allocation0 [shape = 'u32[]', space=smem, size = 0x4, offset = 0x4, fixed_abs, tag = 'smem constant byte address 0x4 - core index']
  #allocation1 [shape = 'u32[72,128]{1,0:T(1,128)}', space=vmem, size = 0x9000, scoped, tag = 'internal scratch']
  %s0 = inlined_call_operand.hbm [shape: f32[2,128,128], index: 0, kind: input, shape index: {}]
  %s1 = inlined_call_operand.hbm [shape: f32[128,128], index: 1, kind: input, shape index: {}]
  %s2 = inlined_call_operand.vmem [shape: f32[1,128], index: 2, kind: input, shape index: {}]
  %s3 = inlined_call_operand.hbm [shape: f32[2,128,128], index: 3, kind: output, shape index: {}]
  %s4 = sld [smem:[#allocation0]]
  $region53: #{tpu_custom_call.1} parent=0
    _
  %s6 = ssub.s32 1, %s4
  %s7 = scalar_select 0, %s6, %s4
  $region1: #{tpu_custom_call.1} parent=0
    #allocation2 [shape = 'u8[131072]{0}', space=vmem, size = 0x20000, scoped, tag = 'input window, operand 0']
    #allocation3 [shape = 's32[2]{0}', space=sflag, size = 0x8, scoped, tag = 'scoped memory for tpu_custom_call.1']
    #allocation4 [shape = 's32[2]{0}', space=sflag, size = 0x8, scoped, tag = 'scoped memory for tpu_custom_call.1']
    #allocation5 [shape = 'u8[65536]{0}', space=vmem, size = 0x10000, scoped, tag = 'input window, operand 1, single buffered']
    #allocation6 [shape = 's32[1]{0}', space=sflag, size = 0x4, scoped, tag = 'scoped memory for tpu_custom_call.1']
    #allocation7 [shape = 'u8[131072]{0}', space=vmem, size = 0x20000, scoped, tag = 'output window, operand 0']
    %8 = vsyncpa [#allocation3], 0
    %s9 = scalar_lea.sflag [#allocation3], 1
    %10 = vsyncpa %s9, 0
    %11 = vsyncpa [#allocation6], 0
    %12 = vsyncpa [#allocation4], 0
    %s13 = scalar_lea.sflag [#allocation4], 1
    %14 = vsyncpa %s13, 0
    loop: start=0, step=1, limit=4
    $region2: #{tpu_custom_call.1} parent=1 // loop_pre_header
      _
    $region3: #{tpu_custom_call.1} parent=1 // loop_header
      %s16 = sphi 0, %s20
      %p17 = scmp.ge.s32.totalorder %s16, 4
      %s23 = sphi 0, %s35
      %s24 = sphi 0, %s31
      %s25 = sphi 0, %s23
      %s26 = sphi 0, %s24
      %s27 = sphi 0, %s25
      %s28 = sphi 0, %s26
      %s40 = sphi 0, %s42
      %s43 = sphi 0, %s40
      %s44 = sphi 0, %s43
      %s60 = sphi 0, %s44
      %s64 = sphi 0, %s64
      %s66 = sphi 0, %s64
      %s67 = sphi 0, %s66
      %s81 = sphi 0, %s67
      %s85 = sphi 0, %s85
      %s87 = sphi 0, %s85
      %s88 = sphi 0, %s87
      %s102 = sphi 0, %s88
      %s110 = sphi 0, %s112
      %s113 = sphi 0, %s110
      %s114 = sphi 0, %s113
      %s130 = sphi 0, %s114
    $region4: #{tpu_custom_call.1} parent=1 // loop_header_branch
      %19 = sbr.rel (%p17) target = $region8
    $region5: #{tpu_custom_call.1} parent=1 // loop_body
      %s21 = ssub.s32 %s16, 1
      %s22 = ssub.s32 %s16, 2
      %s29 = sadd.s32 1, %s24
      %p30 = scmp.ge.s32.totalorder %s29, 1
      %s31 = scalar_select %p30, 0, %s29
      %s32 = sadd.s32 1, %s23
      %s33 = scalar_select %p30, %s32, %s23
      %p34 = scmp.ge.s32.totalorder %s33, 2
      %s35 = scalar_select %p34, 0, %s33
      %s36 = ssub.s32 %s23, %s35
      %s37 = ssub.s32 %s24, %s31
      %s38 = sor.u32 %s36, %s37
      %p39 = scmp.eq.s32.totalorder %s38, 0
      %s41 = sadd.s32 %s40, 1
      %s42 = scalar_select %p39, %s40, %s41
      %p45 = pneg %p39
      %p46 = scmp.eq.s32.totalorder %s16, 1
      %p47 = por %p45, %p46
      %p48 = scmp.ne.s32.totalorder %s40, %s43
      %p49 = scmp.eq.s32.totalorder %s16, 0
      %p50 = por %p48, %p49
      %p51 = scmp.ne.s32.totalorder %s40, %s43
      %p52 = scmp.eq.s32.totalorder %s21, 1
      %p53 = por %p51, %p52
      %p54 = scmp.ne.s32.totalorder %s43, %s44
      %p55 = scmp.eq.s32.totalorder %s21, 0
      %p56 = por %p54, %p55
      %p57 = scmp.ne.s32.totalorder %s43, %s44
      %p58 = scmp.eq.s32.totalorder %s22, 1
      %p59 = por %p57, %p58
      %p61 = scmp.ne.s32.totalorder %s44, %s60
      %p62 = scmp.eq.s32.totalorder %s22, 0
      %p63 = por %p61, %p62
      %s65 = sadd.s32 %s64, 1
      %p68 = scmp.eq.s32.totalorder %s16, 1
      %p69 = scmp.ne.s32.totalorder %s64, %s66
      %p70 = scmp.eq.s32.totalorder %s16, 0
      %p71 = por %p69, %p70
      %p72 = scmp.ne.s32.totalorder %s64, %s66
      %p73 = scmp.eq.s32.totalorder %s21, 1
      %p74 = por %p72, %p73
      %p75 = scmp.ne.s32.totalorder %s66, %s67
      %p76 = scmp.eq.s32.totalorder %s21, 0
      %p77 = por %p75, %p76
      %p78 = scmp.ne.s32.totalorder %s66, %s67
      %p79 = scmp.eq.s32.totalorder %s22, 1
      %p80 = por %p78, %p79
      %p82 = scmp.ne.s32.totalorder %s67, %s81
      %p83 = scmp.eq.s32.totalorder %s22, 0
      %p84 = por %p82, %p83
      %s86 = sadd.s32 %s85, 1
      %p89 = scmp.eq.s32.totalorder %s16, 1
      %p90 = scmp.ne.s32.totalorder %s85, %s87
      %p91 = scmp.eq.s32.totalorder %s16, 0
      %p92 = por %p90, %p91
      %p93 = scmp.ne.s32.totalorder %s85, %s87
      %p94 = scmp.eq.s32.totalorder %s21, 1
      %p95 = por %p93, %p94
      %p96 = scmp.ne.s32.totalorder %s87, %s88
      %p97 = scmp.eq.s32.totalorder %s21, 0
      %p98 = por %p96, %p97
      %p99 = scmp.ne.s32.totalorder %s87, %s88
      %p100 = scmp.eq.s32.totalorder %s22, 1
      %p101 = por %p99, %p100
      %p103 = scmp.ne.s32.totalorder %s88, %s102
      %p104 = scmp.eq.s32.totalorder %s22, 0
      %p105 = por %p103, %p104
      %s106 = ssub.s32 %s23, %s35
      %s107 = ssub.s32 %s24, %s31
      %s108 = sor.u32 %s106, %s107
      %p109 = scmp.eq.s32.totalorder %s108, 0
      %s111 = sadd.s32 %s110, 1
      %s112 = scalar_select %p109, %s110, %s111
      %p115 = pneg %p109
      %p116 = scmp.eq.s32.totalorder %s16, 1
      %p117 = por %p115, %p116
      %p118 = scmp.ne.s32.totalorder %s110, %s113
      %p119 = scmp.eq.s32.totalorder %s16, 0
      %p120 = por %p118, %p119
      %p121 = scmp.ne.s32.totalorder %s110, %s113
      %p122 = scmp.eq.s32.totalorder %s21, 1
      %p123 = por %p121, %p122
      %p124 = scmp.ne.s32.totalorder %s113, %s114
      %p125 = scmp.eq.s32.totalorder %s21, 0
      %p126 = por %p124, %p125
      %p127 = scmp.ne.s32.totalorder %s113, %s114
      %p128 = scmp.eq.s32.totalorder %s22, 1
      %p129 = por %p127, %p128
      %p131 = scmp.ne.s32.totalorder %s114, %s130
      %p132 = scmp.eq.s32.totalorder %s22, 0
      %p133 = por %p131, %p132
      %p134 = scmp.le.s32.totalorder 1, %s16
      %p135 = scmp.lt.s32.totalorder %s16, 3
      %p136 = pnand %p134, %p135
      %p137 = pneg %p136
      // Predicated region
      $region9: #{tpu_custom_call.1} parent=5 // pred_check
        _
      $region10: #{tpu_custom_call.1} parent=5 // pred_check_branch
        %139 = sbr.rel (%p136) target = $region12
      $region11: #{tpu_custom_call.1} parent=5 // pred_region
        %s140 = ssub.s32 %s16, 1
        // Predicated region
        $region13: #{tpu_custom_call.1} parent=11 // pred_check
          %p141 = pneg %p77
        $region14: #{tpu_custom_call.1} parent=11 // pred_check_branch
          %143 = sbr.rel (%p141) target = $region16
        $region15: #{tpu_custom_call.1} parent=11 // pred_region
          %145 = vsyncadd [#allocation6], 0
          %s146 = sshll.u32 %s1, 4
          %s147 = int_to_ptr.hbm [resolvable:$true] %s146
          %s148 = sshll.u32 [#allocation5], 4
          %s149 = int_to_ptr.vmem [resolvable:$true] %s148
          %154 = dma.hbm_to_vmem [thread:$0]  %s147, 2048, %s149, [#allocation6], 128, 128, 8
        $region16: #{tpu_custom_call.1} parent=11 // pred_fallthru
          _
        // Predicated region
        $region17: #{tpu_custom_call.1} parent=11 // pred_check
          %p155 = pneg %p98
        $region18: #{tpu_custom_call.1} parent=11 // pred_check_branch
          %157 = sbr.rel (%p155) target = $region20
        $region19: #{tpu_custom_call.1} parent=11 // pred_region
          _
        $region20: #{tpu_custom_call.1} parent=11 // pred_fallthru
          _
      $region12: #{tpu_custom_call.1} parent=5 // pred_fallthru
        _
      %p158 = scmp.lt.s32.totalorder %s16, 2
      // Predicated region
      $region21: #{tpu_custom_call.1} parent=5 // pred_check
        %p159 = pneg %p158
      $region22: #{tpu_custom_call.1} parent=5 // pred_check_branch
        %161 = sbr.rel (%p159) target = $region24
      $region23: #{tpu_custom_call.1} parent=5 // pred_region
        // Predicated region
        $region25: #{tpu_custom_call.1} parent=23 // pred_check
          %p162 = pneg %p50
        $region26: #{tpu_custom_call.1} parent=23 // pred_check_branch
          %164 = sbr.rel (%p162) target = $region28
        $region27: #{tpu_custom_call.1} parent=23 // pred_region
          %s165 = sand.u32 %s40, 1
          %s166 = scalar_lea.sflag [#allocation3], %s165
          %s167 = sand.u32 %s40, 1
          %s168 = smul.addr %s167, 128
          %s169 = scalar_lea.vmem [#allocation2], %s168
          %171 = vsyncadd %s166, 0
          %s172 = smul.addr %s23, 16
          %s173 = sadd.s32 %s24, %s172
          %s174 = smul.addr %s173, 8
          %s175 = scalar_lea.hbm %s0, %s174
          %s176 = sshll.u32 %s175, 4
          %s177 = int_to_ptr.hbm [resolvable:$true] %s176
          %s178 = sshll.u32 %s169, 4
          %s179 = int_to_ptr.vmem [resolvable:$true] %s178
          %184 = dma.hbm_to_vmem [thread:$0]  %s177, 2048, %s179, %s166, 128, 128, 8
        $region28: #{tpu_custom_call.1} parent=23 // pred_fallthru
          _
      $region24: #{tpu_custom_call.1} parent=5 // pred_fallthru
        _
      %p185 = scmp.le.s32.totalorder 1, %s16
      %p186 = scmp.lt.s32.totalorder %s16, 3
      %p187 = pnand %p185, %p186
      %p188 = pneg %p187
      // Predicated region
      $region29: #{tpu_custom_call.1} parent=5 // pred_check
        _
      $region30: #{tpu_custom_call.1} parent=5 // pred_check_branch
        %190 = sbr.rel (%p187) target = $region32
      $region31: #{tpu_custom_call.1} parent=5 // pred_region
        %s191 = ssub.s32 %s16, 1
        %s192 = sand.u32 %s43, 1
        %s193 = scalar_lea.sflag [#allocation3], %s192
        %s194 = sand.u32 %s43, 1
        %s195 = smul.addr %s194, 128
        %s196 = scalar_lea.vmem [#allocation2], %s195
        // Predicated region
        $region33: #{tpu_custom_call.1} parent=31 // pred_check
          %p197 = pneg %p56
        $region34: #{tpu_custom_call.1} parent=31 // pred_check_branch
          %199 = sbr.rel (%p197) target = $region36
        $region35: #{tpu_custom_call.1} parent=31 // pred_region
          %201 = dma.done %s193, 2048
        $region36: #{tpu_custom_call.1} parent=31 // pred_fallthru
          _
        // Predicated region
        $region37: #{tpu_custom_call.1} parent=31 // pred_check
          %p202 = pneg %p77
        $region38: #{tpu_custom_call.1} parent=31 // pred_check_branch
          %204 = sbr.rel (%p202) target = $region40
        $region39: #{tpu_custom_call.1} parent=31 // pred_region
          %206 = dma.done [#allocation6], 2048
        $region40: #{tpu_custom_call.1} parent=31 // pred_fallthru
          _
        %s207 = sand.u32 %s43, 1
        %s208 = scalar_lea.sflag [#allocation3], %s207
        %s209 = sand.u32 %s43, 1
        %s210 = smul.addr %s209, 128
        %s211 = scalar_lea.vmem [#allocation2], %s210
        %p212 = pneg %p56
        %p213 = pneg %p53
        %p214 = pneg %p77
        %p215 = pneg %p74
        %p216 = pneg %p98
        %p217 = pneg %p95
        %p218 = pneg %p126
        %p219 = pneg %p123
        %s220 = sand.u32 %s113, 1
        %s221 = scalar_lea.sflag [#allocation4], %s220
        %s222 = sand.u32 %s113, 1
        %s223 = smul.addr %s222, 128
        %s224 = scalar_lea.vmem [#allocation7], %s223
        %s225 = smul.u32 16, %s26
        %v226 = vld [vmem:[%s196] sm:$0xff]
        %v227 = vld [vmem:[%s196 + $0x8] sm:$0xff]
        %v228 = vld [vmem:[%s196 + $0x10] sm:$0xff]
        %v229 = vld [vmem:[%s196 + $0x18] sm:$0xff]
        %v230 = vld [vmem:[%s196 + $0x20] sm:$0xff]
        %v231 = vld [vmem:[%s196 + $0x28] sm:$0xff]
        %v232 = vld [vmem:[%s196 + $0x30] sm:$0xff]
        %v233 = vld [vmem:[%s196 + $0x38] sm:$0xff]
        %v234 = vld [vmem:[%s196 + $0x40] sm:$0xff]
        %v235 = vld [vmem:[%s196 + $0x48] sm:$0xff]
        %v236 = vld [vmem:[%s196 + $0x50] sm:$0xff]
        %v237 = vld [vmem:[%s196 + $0x58] sm:$0xff]
        %v238 = vld [vmem:[%s196 + $0x60] sm:$0xff]
        %v239 = vld [vmem:[%s196 + $0x68] sm:$0xff]
        %v240 = vld [vmem:[%s196 + $0x70] sm:$0xff]
        %v241 = vld [vmem:[%s196 + $0x78] sm:$0xff]
        %v242 = vld [vmem:[#allocation5] sm:$0xff]
        %v243 = vld [vmem:[#allocation5 + $0x8] sm:$0xff]
        %v244 = vld [vmem:[#allocation5 + $0x10] sm:$0xff]
        %v245 = vld [vmem:[#allocation5 + $0x18] sm:$0xff]
        %v246 = vld [vmem:[#allocation5 + $0x20] sm:$0xff]
        %v247 = vld [vmem:[#allocation5 + $0x28] sm:$0xff]
        %v248 = vld [vmem:[#allocation5 + $0x30] sm:$0xff]
        %v249 = vld [vmem:[#allocation5 + $0x38] sm:$0xff]
        %v250 = vld [vmem:[#allocation5 + $0x40] sm:$0xff]
        %v251 = vld [vmem:[#allocation5 + $0x48] sm:$0xff]
        %v252 = vld [vmem:[#allocation5 + $0x50] sm:$0xff]
        %v253 = vld [vmem:[#allocation5 + $0x58] sm:$0xff]
        %v254 = vld [vmem:[#allocation5 + $0x60] sm:$0xff]
        %v255 = vld [vmem:[#allocation5 + $0x68] sm:$0xff]
        %v256 = vld [vmem:[#allocation5 + $0x70] sm:$0xff]
        %v257 = vld [vmem:[#allocation5 + $0x78] sm:$0xff]
        %258 = vmatpush.msra.mxu0 %v241
        %259 = vmatpush.msra.mxu0 %v240
        %260 = vmatpush.msra.mxu0 %v239
        %261 = vmatpush.msra.mxu0 %v238
        %262 = vmatpush.msra.mxu0 %v237
        %263 = vmatpush.msra.mxu0 %v236
        %264 = vmatpush.msra.mxu0 %v235
        %265 = vmatpush.msra.mxu0 %v234
        %266 = vmatpush.msra.mxu0 %v233
        %267 = vmatpush.msra.mxu0 %v232
        %268 = vmatpush.msra.mxu0 %v231
        %269 = vmatpush.msra.mxu0 %v230
        %270 = vmatpush.msra.mxu0 %v229
        %271 = vmatpush.msra.mxu0 %v228
        %272 = vmatpush.msra.mxu0 %v227
        %273 = vmatpush.msra.mxu0 %v226
        %274 = vmatmul.f32.gmra.mxu0 %v242
        %v275 = vpop.f32.mrf.mxu0
        %v276 = vadd.f32 0.0, %v275
        %277 = vmatmul.f32.gmra.mxu0 %v243
        %v278 = vpop.f32.mrf.mxu0
        %v279 = vadd.f32 0.0, %v278
        %280 = vmatmul.f32.gmra.mxu0 %v244
        %v281 = vpop.f32.mrf.mxu0
        %v282 = vadd.f32 0.0, %v281
        %283 = vmatmul.f32.gmra.mxu0 %v245
        %v284 = vpop.f32.mrf.mxu0
        %v285 = vadd.f32 0.0, %v284
        %286 = vmatmul.f32.gmra.mxu0 %v246
        %v287 = vpop.f32.mrf.mxu0
        %v288 = vadd.f32 0.0, %v287
        %289 = vmatmul.f32.gmra.mxu0 %v247
        %v290 = vpop.f32.mrf.mxu0
        %v291 = vadd.f32 0.0, %v290
        %292 = vmatmul.f32.gmra.mxu0 %v248
        %v293 = vpop.f32.mrf.mxu0
        %v294 = vadd.f32 0.0, %v293
        %295 = vmatmul.f32.gmra.mxu0 %v249
        %v296 = vpop.f32.mrf.mxu0
        %v297 = vadd.f32 0.0, %v296
        %298 = vmatmul.f32.gmra.mxu0 %v250
        %v299 = vpop.f32.mrf.mxu0
        %v300 = vadd.f32 0.0, %v299
        %301 = vmatmul.f32.gmra.mxu0 %v251
        %v302 = vpop.f32.mrf.mxu0
        %v303 = vadd.f32 0.0, %v302
        %304 = vmatmul.f32.gmra.mxu0 %v252
        %v305 = vpop.f32.mrf.mxu0
        %v306 = vadd.f32 0.0, %v305
        %307 = vmatmul.f32.gmra.mxu0 %v253
        %v308 = vpop.f32.mrf.mxu0
        %v309 = vadd.f32 0.0, %v308
        %310 = vmatmul.f32.gmra.mxu0 %v254
        %v311 = vpop.f32.mrf.mxu0
        %v312 = vadd.f32 0.0, %v311
        %313 = vmatmul.f32.gmra.mxu0 %v255
        %v314 = vpop.f32.mrf.mxu0
        %v315 = vadd.f32 0.0, %v314
        %316 = vmatmul.f32.gmra.mxu0 %v256
        %v317 = vpop.f32.mrf.mxu0
        %v318 = vadd.f32 0.0, %v317
        %319 = vmatmul.f32.gmra.mxu0 %v257
        %v320 = vpop.f32.mrf.mxu0
        %v321 = vadd.f32 0.0, %v320
        %322 = vdwg.mxu0
        %v323 = vadd.f32 %v226, %v276
        %v324 = vadd.f32 %v227, %v279
        %v325 = vadd.f32 %v228, %v282
        %v326 = vadd.f32 %v229, %v285
        %v327 = vadd.f32 %v230, %v288
        %v328 = vadd.f32 %v231, %v291
        %v329 = vadd.f32 %v232, %v294
        %v330 = vadd.f32 %v233, %v297
        %v331 = vadd.f32 %v234, %v300
        %v332 = vadd.f32 %v235, %v303
        %v333 = vadd.f32 %v236, %v306
        %v334 = vadd.f32 %v237, %v309
        %v335 = vadd.f32 %v238, %v312
        %v336 = vadd.f32 %v239, %v315
        %v337 = vadd.f32 %v240, %v318
        %v338 = vadd.f32 %v241, %v321
        %339 = vxpose.xlu0.b32.start [1/16] %v323, 128
        %340 = vxpose.xlu0.b32.cont [2/16] %v324, 128
        %341 = vxpose.xlu0.b32.cont [3/16] %v325, 128
        %342 = vxpose.xlu0.b32.cont [4/16] %v326, 128
        %343 = vxpose.xlu0.b32.cont [5/16] %v327, 128
        %344 = vxpose.xlu0.b32.cont [6/16] %v328, 128
        %345 = vxpose.xlu0.b32.cont [7/16] %v329, 128
        %346 = vxpose.xlu0.b32.cont [8/16] %v330, 128
        %347 = vxpose.xlu0.b32.cont [9/16] %v331, 128
        %348 = vxpose.xlu0.b32.cont [10/16] %v332, 128
        %349 = vxpose.xlu0.b32.cont [11/16] %v333, 128
        %350 = vxpose.xlu0.b32.cont [12/16] %v334, 128
        %351 = vxpose.xlu0.b32.cont [13/16] %v335, 128
        %352 = vxpose.xlu0.b32.cont [14/16] %v336, 128
        %353 = vxpose.xlu0.b32.cont [15/16] %v337, 128
        %354 = vxpose.xlu0.b32.end [16/16] %v338, 128
        %v355 = vpop.trf.xlu0
        %v356 = vpop.trf.xlu0
        %v357 = vpop.trf.xlu0
        %v358 = vpop.trf.xlu0
        %v359 = vpop.trf.xlu0
        %v360 = vpop.trf.xlu0
        %v361 = vpop.trf.xlu0
        %v362 = vpop.trf.xlu0
        %v363 = vpop.trf.xlu0
        %v364 = vpop.trf.xlu0
        %v365 = vpop.trf.xlu0
        %v366 = vpop.trf.xlu0
        %v367 = vpop.trf.xlu0
        %v368 = vpop.trf.xlu0
        %v369 = vpop.trf.xlu0
        %v370 = vpop.trf.xlu0
        %v371 = vld [vmem:[%s2] sm:$0x1]
        %v373 = vperm.slane %v371, 0
        %v375 = vadd.f32 %v355, %v373
        %v376 = vadd.f32 %v356, %v373
        %v377 = vadd.f32 %v357, %v373
        %v378 = vadd.f32 %v358, %v373
        %v379 = vadd.f32 %v359, %v373
        %v380 = vadd.f32 %v360, %v373
        %v381 = vadd.f32 %v361, %v373
        %v382 = vadd.f32 %v362, %v373
        %v383 = vadd.f32 %v363, %v373
        %v384 = vadd.f32 %v364, %v373
        %v385 = vadd.f32 %v365, %v373
        %v386 = vadd.f32 %v366, %v373
        %v387 = vadd.f32 %v367, %v373
        %v388 = vadd.f32 %v368, %v373
        %v389 = vadd.f32 %v369, %v373
        %v390 = vadd.f32 %v370, %v373
        %391 = vst [vmem:[%s224] sm:$0xff] %v375
        %392 = vst [vmem:[%s224 + $0x8] sm:$0xff] %v376
        %393 = vst [vmem:[%s224 + $0x10] sm:$0xff] %v377
        %394 = vst [vmem:[%s224 + $0x18] sm:$0xff] %v378
        %395 = vst [vmem:[%s224 + $0x20] sm:$0xff] %v379
        %396 = vst [vmem:[%s224 + $0x28] sm:$0xff] %v380
        %397 = vst [vmem:[%s224 + $0x30] sm:$0xff] %v381
        %398 = vst [vmem:[%s224 + $0x38] sm:$0xff] %v382
        %399 = vst [vmem:[%s224 + $0x40] sm:$0xff] %v383
        %400 = vst [vmem:[%s224 + $0x48] sm:$0xff] %v384
        %401 = vst [vmem:[%s224 + $0x50] sm:$0xff] %v385
        %402 = vst [vmem:[%s224 + $0x58] sm:$0xff] %v386
        %403 = vst [vmem:[%s224 + $0x60] sm:$0xff] %v387
        %404 = vst [vmem:[%s224 + $0x68] sm:$0xff] %v388
        %405 = vst [vmem:[%s224 + $0x70] sm:$0xff] %v389
        %406 = vst [vmem:[%s224 + $0x78] sm:$0xff] %v390
        %s407 = sand.u32 %s113, 1
        %s408 = scalar_lea.sflag [#allocation4], %s407
        %s409 = sand.u32 %s113, 1
        %s410 = smul.addr %s409, 128
        %s411 = scalar_lea.vmem [#allocation7], %s410
        // Predicated region
        $region41: #{tpu_custom_call.1} parent=31 // pred_check
          %p412 = pneg %p123
        $region42: #{tpu_custom_call.1} parent=31 // pred_check_branch
          %414 = sbr.rel (%p412) target = $region44
        $region43: #{tpu_custom_call.1} parent=31 // pred_region
          %s415 = smul.u32 16, %s26
          %417 = vsyncadd %s408, 0
          %s418 = smul.addr %s25, 16
          %s419 = sadd.s32 %s415, %s418
          %s420 = smul.addr %s419, 8
          %s421 = scalar_lea.hbm %s3, %s420
          %s422 = sshll.u32 %s411, 4
          %s423 = int_to_ptr.vmem [resolvable:$true] %s422
          %s424 = sshll.u32 %s421, 4
          %s425 = int_to_ptr.hbm [resolvable:$true] %s424
          %430 = dma.vmem_to_hbm [thread:$0]  %s423, 2048, %s425, %s408, 128, 128, 8
        $region44: #{tpu_custom_call.1} parent=31 // pred_fallthru
          _
      $region32: #{tpu_custom_call.1} parent=5 // pred_fallthru
        _
      %p431 = scmp.le.s32.totalorder 2, %s16
      // Predicated region
      $region45: #{tpu_custom_call.1} parent=5 // pred_check
        %p432 = pneg %p431
      $region46: #{tpu_custom_call.1} parent=5 // pred_check_branch
        %434 = sbr.rel (%p432) target = $region48
      $region47: #{tpu_custom_call.1} parent=5 // pred_region
        %s435 = ssub.s32 %s16, 2
        // Predicated region
        $region49: #{tpu_custom_call.1} parent=47 // pred_check
          %p436 = pneg %p129
        $region50: #{tpu_custom_call.1} parent=47 // pred_check_branch
          %438 = sbr.rel (%p436) target = $region52
        $region51: #{tpu_custom_call.1} parent=47 // pred_region
          %s439 = sand.u32 %s114, 1
          %s440 = scalar_lea.sflag [#allocation4], %s439
          %s441 = sand.u32 %s114, 1
          %s442 = smul.addr %s441, 128
          %s443 = scalar_lea.vmem [#allocation7], %s442
          %445 = dma.done %s440, 2048
        $region52: #{tpu_custom_call.1} parent=47 // pred_fallthru
          _
      $region48: #{tpu_custom_call.1} parent=5 // pred_fallthru
        _
    $region6: #{tpu_custom_call.1} parent=1 // loop_footer
      %s20 = sadd.s32 1, %s16
    $region7: #{tpu_custom_call.1} parent=1 // loop_footer_branch
      %15 = sbr.rel target = $region3
    $region8: #{tpu_custom_call.1} parent=1 // loop_exit
      _
    %446 = vsyncpa [#allocation3], 1
    %s447 = scalar_lea.sflag [#allocation3], 1
    %448 = vsyncpa %s447, 1
    %449 = vsyncpa [#allocation6], 1
    %450 = vsyncpa [#allocation4], 1
    %s451 = scalar_lea.sflag [#allocation4], 1
    %452 = vsyncpa %s451, 1

</llo_original>
